<compile_context>
chip_gen: v7x
topology: tpu7x:2x2x1
jax: 0.10.0
libtpu: 0.0.40
codegen_flags: <defaults>
</compile_context>

<pallas_src>
import functools
import math

import jax
import jax.numpy as jnp
from jax.experimental import pallas as pl
from jax.experimental.pallas import tpu as pltpu


# conv tap order (dh outer, dw inner) -- must match the weight fold + mask order
_TAPS = ((-1, -1), (-1, 0), (-1, 1),
         (0, -1),  (0, 0),  (0, 1),
         (1, -1),  (1, 0),  (1, 1))


# ----------------------------------------------------------------------------
# Fused kernel: stage im2col in VMEM scratch -> one expand matmul -> gelu*gate
#               -> one projection matmul
# ----------------------------------------------------------------------------
def _ffn_fused_kernel(x_ref, m_ref, wab_ref, bab_ref, wp_ref, bp_ref, o_ref,
                      x_scr, *, W, C, Cc_pad, hidden, mxu_bf16):
    x = x_ref[0].astype(jnp.float32)              # (C, N) with N = Bt*H*W (lane axis)
    N = x.shape[-1]

    # --- im2col staging into the 8-row-aligned scratch ----------------------
    # Rows [t*Cc_pad, (t+1)*Cc_pad): tap t of the 3x3 partial conv.  Rows >= Cc
    # carry untouched-channel data but their weight columns are zero, so no
    # channel mask is needed.
    x1p = x[:Cc_pad, :]
    for t, (dh, dw) in enumerate(_TAPS):
        s = dh * W + dw                           # flat lane shift of this tap
        xs = x1p if s == 0 else pltpu.roll(x1p, shift=(-s) % N, axis=1)
        # border mask zeroes sources outside the image (conv padding=1); the same
        # per-image (mod H*W) mask also kills cross-image wrap when several images
        # share the lane axis.
        x_scr[t * Cc_pad:(t + 1) * Cc_pad, :] = xs * m_ref[t:t + 1, :]
    # Rows [9*Cc_pad, 9*Cc_pad + C): the raw input slab (direct path of the
    # untouched channels; weight columns of the first Cc rows are zero).
    base = 9 * Cc_pad
    x_scr[base:base + C, :] = x

    X = x_scr[...]
    wab = wab_ref[...]
    wp = wp_ref[...]
    if mxu_bf16:
        X = X.astype(jnp.bfloat16)
        wab = wab.astype(jnp.bfloat16)
        wp = wp.astype(jnp.bfloat16)

    # --- fused expand: conv-folded 1x1, both halves in ONE MXU pass ---------
    h = jnp.dot(wab, X, preferred_element_type=jnp.float32) + bab_ref[...]
    a = h[:hidden, :]                             # GELU half (aligned row split)
    b = h[hidden:, :]                             # gate half
    # exact (erf-based) GELU, matching torch.nn.functional.gelu's default
    g = 0.5 * a * (1.0 + jax.lax.erf(a * (1.0 / math.sqrt(2.0)))) * b
    if mxu_bf16:
        g = g.astype(jnp.bfloat16)

    # --- 1x1 projection ------------------------------------------------------
    out = jnp.dot(wp, g, preferred_element_type=jnp.float32) + bp_ref[...]
    o_ref[0] = out.astype(o_ref.dtype)


# ----------------------------------------------------------------------------
# Wrapper
# ----------------------------------------------------------------------------
def feedforward(x_nchw, w3, w2, b2, wp, bp, *, batch_block=None, mxu_bf16=False):
    """x_nchw: (B, C, H, W).  w3: (3,3,Cc,Cc) HWIO (no bias).  w2: (C, 2*hidden).
    b2: (1, 2*hidden).  wp: (hidden, C).  bp: (1, C).  Returns (B, C, H, W)."""
    B, C, H, W = x_nchw.shape
    Cc = C // 4                                   # dim_conv3 (n_div = 4)
    hidden2 = w2.shape[1]
    hidden = hidden2 // 2
    HW = H * W
    assert C % 8 == 0 and hidden % 8 == 0
    Cc_pad = ((Cc + 7) // 8) * 8                  # 8-aligned tap block height
    assert Cc_pad <= C
    K_pad = 9 * Cc_pad + C
    assert wp.shape == (hidden, C)

    # images per grid step: fuse batch onto the lane axis, but keep >=2 parallel
    # grid steps when possible so both v7x TensorCores get work.
    if batch_block is None:
        batch_block = B // 2 if (B >= 2 and B % 2 == 0) else 1
    Bt = batch_block
    assert B % Bt == 0
    G = B // Bt
    N_lane = Bt * HW

    hi = jax.lax.Precision.HIGHEST                # weight folding in full precision

    # ---- weight prep (tiny, runs once in XLA) ----
    w2t = jnp.transpose(w2)                                       # (2*hidden, C)
    # Fold the 3x3 partial conv into the expand weight, tap by tap.
    w_taps = jnp.einsum('ho,dwio->dwhi', w2t[:, :Cc], w3, precision=hi)  # (3,3,2h,Cc)
    w_taps = jnp.pad(w_taps, ((0, 0), (0, 0), (0, 0), (0, Cc_pad - Cc)))
    w_taps = jnp.transpose(w_taps, (2, 0, 1, 3)).reshape(hidden2, 9 * Cc_pad)
    w_rest = w2t.at[:, :Cc].set(0.0)              # direct path: untouched channels only
    wab = jnp.concatenate([w_taps, w_rest], axis=1)               # (2*hidden, K_pad)
    bab = b2[0].reshape(hidden2, 1)
    wp_t = jnp.transpose(wp)                                      # (C, hidden)
    bp_c = bp[0].reshape(C, 1)

    # ---- conv border masks, precomputed once (grid-invariant) ----
    pos = jnp.arange(HW, dtype=jnp.int32)
    row = pos // W
    col = pos % W
    mlist = []
    for dh, dw in _TAPS:
        ok = ((row + dh >= 0) & (row + dh <= H - 1) &
              (col + dw >= 0) & (col + dw <= W - 1))
        mlist.append(ok)
    masks = jnp.stack(mlist).astype(jnp.float32)                  # (9, HW)
    if Bt > 1:
        masks = jnp.tile(masks, (1, Bt))                          # (9, N_lane)

    # ---- lane-dense view: (G, C, Bt*HW); free reshape when Bt == 1 ----
    if Bt == 1:
        x_g = x_nchw.reshape(B, C, HW)
    else:
        x_g = (x_nchw.reshape(G, Bt, C, HW)
               .transpose(0, 2, 1, 3)
               .reshape(G, C, N_lane))

    out_g = pl.pallas_call(
        functools.partial(_ffn_fused_kernel, W=W, C=C, Cc_pad=Cc_pad,
                          hidden=hidden, mxu_bf16=mxu_bf16),
        out_shape=jax.ShapeDtypeStruct((G, C, N_lane), x_nchw.dtype),
        grid_spec=pltpu.PrefetchScalarGridSpec(
            num_scalar_prefetch=0,
            grid=(G,),
            in_specs=[
                pl.BlockSpec((1, C, N_lane), lambda g: (g, 0, 0)),   # x tile
                pl.BlockSpec((9, N_lane), lambda g: (0, 0)),         # border masks
                pl.BlockSpec((hidden2, K_pad), lambda g: (0, 0)),    # fused expand W
                pl.BlockSpec((hidden2, 1), lambda g: (0, 0)),        # expand bias
                pl.BlockSpec((C, hidden), lambda g: (0, 0)),         # projection W
                pl.BlockSpec((C, 1), lambda g: (0, 0)),              # projection bias
            ],
            out_specs=pl.BlockSpec((1, C, N_lane), lambda g: (g, 0, 0)),
            scratch_shapes=[pltpu.VMEM((K_pad, N_lane), jnp.float32)],
        ),
        compiler_params=pltpu.CompilerParams(
            dimension_semantics=("parallel",)),
    )(x_g, masks, wab, bab, wp_t, bp_c)

    if Bt == 1:
        return out_g.reshape(B, C, H, W)
    return (out_g.reshape(G, C, Bt, HW)
            .transpose(0, 2, 1, 3)
            .reshape(B, C, H, W))


# ----------------------------------------------------------------------------
# Pure-JAX reference (for correctness check)
# ----------------------------------------------------------------------------
def feedforward_ref(x_nchw, w3, w2, b2, wp, bp):
    B, C, H, W = x_nchw.shape
    Cc = C // 4
    hidden = wp.shape[0]
    x = jnp.transpose(x_nchw, (0, 2, 3, 1))
    x1 = x[..., :Cc]
    x2 = x[..., Cc:]
    y1 = jax.lax.conv_general_dilated(
        x1, w3, window_strides=(1, 1), padding="SAME",
        dimension_numbers=("NHWC", "HWIO", "NHWC"))
    xc = jnp.concatenate([y1, x2], axis=-1)
    h = jnp.einsum("bhwc,cd->bhwd", xc, w2) + b2[0]
    a, bgate = h[..., :hidden], h[..., hidden:]
    g = 0.5 * a * (1.0 + jax.lax.erf(a / jnp.sqrt(2.0))) * bgate
    out = jnp.einsum("bhwc,cd->bhwd", g, wp) + bp[0]
    return jnp.transpose(out, (0, 3, 1, 2))


if __name__ == "__main__":
    # Module config: dim=16, ffn_expansion_factor=2, bias=True
    dim = 16
    ffn_expansion_factor = 2
    hidden = int(dim * ffn_expansion_factor)          # 32
    Cc = dim // 4                                     # 4
    B, H, W = 2, 16, 16

    key = jax.random.PRNGKey(0)
    kx, k3, k2, kb2, kp, kbp = jax.random.split(key, 6)

    x = jax.random.normal(kx, (B, dim, H, W), jnp.float32)
    # Partial_conv3 weight: HWIO (3, 3, Cc, Cc), no bias
    w3 = jax.random.normal(k3, (3, 3, Cc, Cc), jnp.float32) * 0.1
    # conv2 (1x1): dim -> 2*hidden, with bias
    w2 = jax.random.normal(k2, (dim, 2 * hidden), jnp.float32) * 0.1
    b2 = jax.random.normal(kb2, (1, 2 * hidden), jnp.float32) * 0.1
    # project_out (1x1): hidden -> dim, with bias
    wp = jax.random.normal(kp, (hidden, dim), jnp.float32) * 0.1
    bp = jax.random.normal(kbp, (1, dim), jnp.float32) * 0.1

    ref = feedforward_ref(x, w3, w2, b2, wp, bp)

    # 1) default: f32 MXU inputs, one image per step (2 parallel grid steps)
    out = jax.block_until_ready(jax.jit(feedforward)(x, w3, w2, b2, wp, bp))
    assert out.shape == (B, dim, H, W)
    err = jnp.max(jnp.abs(out - ref))
    assert jnp.allclose(out, ref, atol=1e-4, rtol=1e-4), f"f32 max abs err {err}"

    # 2) batch fused onto the lane axis (N = B*H*W, single grid step)
    out_b = jax.block_until_ready(
        jax.jit(functools.partial(feedforward, batch_block=B))(x, w3, w2, b2, wp, bp))
    err_b = jnp.max(jnp.abs(out_b - ref))
    assert jnp.allclose(out_b, ref, atol=1e-4, rtol=1e-4), f"batched max abs err {err_b}"

    # 3) bf16 MXU inputs with f32 accumulation (looser tolerance)
    out_bf = jax.block_until_ready(
        jax.jit(functools.partial(feedforward, mxu_bf16=True))(x, w3, w2, b2, wp, bp))
    err_bf = jnp.max(jnp.abs(out_bf - ref))
    assert jnp.allclose(out_bf, ref, atol=5e-2, rtol=5e-2), f"bf16 max abs err {err_bf}"

    print("KERNEL_OK")
</pallas_src>

<mosaic_0001>
module attributes {stable_mosaic.version = 11 : i64} {
  func.func @_ffn_fused_kernel(%arg0: i32, %arg1: memref<1x16x256xf32, #tpu.memory_space<vmem>>, %arg2: memref<9x256xf32, #tpu.memory_space<vmem>>, %arg3: memref<64x88xf32, #tpu.memory_space<vmem>>, %arg4: memref<64x1xf32, #tpu.memory_space<vmem>>, %arg5: memref<16x32xf32, #tpu.memory_space<vmem>>, %arg6: memref<16x1xf32, #tpu.memory_space<vmem>>, %arg7: memref<1x16x256xf32, #tpu.memory_space<vmem>>, %arg8: memref<88x256xf32, #tpu.memory_space<vmem>>) attributes {dimension_semantics = [#tpu.dimension_semantics<parallel>], iteration_bounds = array<i64: 2>, scalar_prefetch = 0 : i64, scratch_operands = 1 : i64, tpu.core_type = #tpu.core_type<tc>, window_params = [{transform_indices = @transform_0, window_bounds = array<i64: 1, 16, 256>}, {pipeline_mode = #tpu.pipeline_mode<synchronous>, transform_indices = @transform_1, window_bounds = array<i64: 9, 256>}, {pipeline_mode = #tpu.pipeline_mode<synchronous>, transform_indices = @transform_2, window_bounds = array<i64: 64, 88>}, {pipeline_mode = #tpu.pipeline_mode<synchronous>, transform_indices = @transform_3, window_bounds = array<i64: 64, 1>}, {pipeline_mode = #tpu.pipeline_mode<synchronous>, transform_indices = @transform_4, window_bounds = array<i64: 16, 32>}, {pipeline_mode = #tpu.pipeline_mode<synchronous>, transform_indices = @transform_5, window_bounds = array<i64: 16, 1>}, {transform_indices = @transform_6, window_bounds = array<i64: 1, 16, 256>}]} {
    %c0 = arith.constant 0 : index
    %c0_0 = arith.constant 0 : index
    %c0_1 = arith.constant 0 : index
    %0 = vector.load %arg1[%c0, %c0_0, %c0_1] : memref<1x16x256xf32, #tpu.memory_space<vmem>>, vector<1x16x256xf32>
    %1 = vector.shape_cast %0 : vector<1x16x256xf32> to vector<16x256xf32>
    %2 = vector.extract_strided_slice %1 {offsets = [0, 0], sizes = [8, 256], strides = [1, 1]} : vector<16x256xf32> to vector<8x256xf32>
    %c17_i32 = arith.constant 17 : i32
    %3 = tpu.dynamic_rotate %2 by %c17_i32 dim 1 : vector<8x256xf32>, i32 -> vector<8x256xf32>
    %c0_2 = arith.constant 0 : index
    %c0_3 = arith.constant 0 : index
    %4 = vector.load %arg2[%c0_2, %c0_3] : memref<9x256xf32, #tpu.memory_space<vmem>>, vector<1x256xf32>
    %5 = vector.broadcast %4 : vector<1x256xf32> to vector<8x256xf32>
    %6 = arith.mulf %3, %5 : vector<8x256xf32>
    %c0_4 = arith.constant 0 : index
    %c0_5 = arith.constant 0 : index
    %7 = vector.load %arg8[%c0_4, %c0_5] : memref<88x256xf32, #tpu.memory_space<vmem>>, vector<8x256xf32>
    tpu.vector_store %arg8[%c0_4, %c0_5], %6 {strides = array<i32>} : memref<88x256xf32, #tpu.memory_space<vmem>>, vector<8x256xf32>,
    %c16_i32 = arith.constant 16 : i32
    %8 = tpu.dynamic_rotate %2 by %c16_i32 dim 1 : vector<8x256xf32>, i32 -> vector<8x256xf32>
    %c1 = arith.constant 1 : index
    %c0_6 = arith.constant 0 : index
    %9 = vector.load %arg2[%c1, %c0_6] : memref<9x256xf32, #tpu.memory_space<vmem>>, vector<1x256xf32>
    %10 = vector.broadcast %9 : vector<1x256xf32> to vector<8x256xf32>
    %11 = arith.mulf %8, %10 : vector<8x256xf32>
    %c8 = arith.constant 8 : index
    %c0_7 = arith.constant 0 : index
    %12 = vector.load %arg8[%c8, %c0_7] : memref<88x256xf32, #tpu.memory_space<vmem>>, vector<8x256xf32>
    tpu.vector_store %arg8[%c8, %c0_7], %11 {strides = array<i32>} : memref<88x256xf32, #tpu.memory_space<vmem>>, vector<8x256xf32>,
    %c15_i32 = arith.constant 15 : i32
    %13 = tpu.dynamic_rotate %2 by %c15_i32 dim 1 : vector<8x256xf32>, i32 -> vector<8x256xf32>
    %c2 = arith.constant 2 : index
    %c0_8 = arith.constant 0 : index
    %14 = vector.load %arg2[%c2, %c0_8] : memref<9x256xf32, #tpu.memory_space<vmem>>, vector<1x256xf32>
    %15 = vector.broadcast %14 : vector<1x256xf32> to vector<8x256xf32>
    %16 = arith.mulf %13, %15 : vector<8x256xf32>
    %c16 = arith.constant 16 : index
    %c0_9 = arith.constant 0 : index
    %17 = vector.load %arg8[%c16, %c0_9] : memref<88x256xf32, #tpu.memory_space<vmem>>, vector<8x256xf32>
    tpu.vector_store %arg8[%c16, %c0_9], %16 {strides = array<i32>} : memref<88x256xf32, #tpu.memory_space<vmem>>, vector<8x256xf32>,
    %c1_i32 = arith.constant 1 : i32
    %18 = tpu.dynamic_rotate %2 by %c1_i32 dim 1 : vector<8x256xf32>, i32 -> vector<8x256xf32>
    %c3 = arith.constant 3 : index
    %c0_10 = arith.constant 0 : index
    %19 = vector.load %arg2[%c3, %c0_10] : memref<9x256xf32, #tpu.memory_space<vmem>>, vector<1x256xf32>
    %20 = vector.broadcast %19 : vector<1x256xf32> to vector<8x256xf32>
    %21 = arith.mulf %18, %20 : vector<8x256xf32>
    %c24 = arith.constant 24 : index
    %c0_11 = arith.constant 0 : index
    %22 = vector.load %arg8[%c24, %c0_11] : memref<88x256xf32, #tpu.memory_space<vmem>>, vector<8x256xf32>
    tpu.vector_store %arg8[%c24, %c0_11], %21 {strides = array<i32>} : memref<88x256xf32, #tpu.memory_space<vmem>>, vector<8x256xf32>,
    %c4 = arith.constant 4 : index
    %c0_12 = arith.constant 0 : index
    %23 = vector.load %arg2[%c4, %c0_12] : memref<9x256xf32, #tpu.memory_space<vmem>>, vector<1x256xf32>
    %24 = vector.broadcast %23 : vector<1x256xf32> to vector<8x256xf32>
    %25 = arith.mulf %2, %24 : vector<8x256xf32>
    %c32 = arith.constant 32 : index
    %c0_13 = arith.constant 0 : index
    %26 = vector.load %arg8[%c32, %c0_13] : memref<88x256xf32, #tpu.memory_space<vmem>>, vector<8x256xf32>
    tpu.vector_store %arg8[%c32, %c0_13], %25 {strides = array<i32>} : memref<88x256xf32, #tpu.memory_space<vmem>>, vector<8x256xf32>,
    %c255_i32 = arith.constant 255 : i32
    %27 = tpu.dynamic_rotate %2 by %c255_i32 dim 1 : vector<8x256xf32>, i32 -> vector<8x256xf32>
    %c5 = arith.constant 5 : index
    %c0_14 = arith.constant 0 : index
    %28 = vector.load %arg2[%c5, %c0_14] : memref<9x256xf32, #tpu.memory_space<vmem>>, vector<1x256xf32>
    %29 = vector.broadcast %28 : vector<1x256xf32> to vector<8x256xf32>
    %30 = arith.mulf %27, %29 : vector<8x256xf32>
    %c40 = arith.constant 40 : index
    %c0_15 = arith.constant 0 : index
    %31 = vector.load %arg8[%c40, %c0_15] : memref<88x256xf32, #tpu.memory_space<vmem>>, vector<8x256xf32>
    tpu.vector_store %arg8[%c40, %c0_15], %30 {strides = array<i32>} : memref<88x256xf32, #tpu.memory_space<vmem>>, vector<8x256xf32>,
    %c241_i32 = arith.constant 241 : i32
    %32 = tpu.dynamic_rotate %2 by %c241_i32 dim 1 : vector<8x256xf32>, i32 -> vector<8x256xf32>
    %c6 = arith.constant 6 : index
    %c0_16 = arith.constant 0 : index
    %33 = vector.load %arg2[%c6, %c0_16] : memref<9x256xf32, #tpu.memory_space<vmem>>, vector<1x256xf32>
    %34 = vector.broadcast %33 : vector<1x256xf32> to vector<8x256xf32>
    %35 = arith.mulf %32, %34 : vector<8x256xf32>
    %c48 = arith.constant 48 : index
    %c0_17 = arith.constant 0 : index
    %36 = vector.load %arg8[%c48, %c0_17] : memref<88x256xf32, #tpu.memory_space<vmem>>, vector<8x256xf32>
    tpu.vector_store %arg8[%c48, %c0_17], %35 {strides = array<i32>} : memref<88x256xf32, #tpu.memory_space<vmem>>, vector<8x256xf32>,
    %c240_i32 = arith.constant 240 : i32
    %37 = tpu.dynamic_rotate %2 by %c240_i32 dim 1 : vector<8x256xf32>, i32 -> vector<8x256xf32>
    %c7 = arith.constant 7 : index
    %c0_18 = arith.constant 0 : index
    %38 = vector.load %arg2[%c7, %c0_18] : memref<9x256xf32, #tpu.memory_space<vmem>>, vector<1x256xf32>
    %39 = vector.broadcast %38 : vector<1x256xf32> to vector<8x256xf32>
    %40 = arith.mulf %37, %39 : vector<8x256xf32>
    %c56 = arith.constant 56 : index
    %c0_19 = arith.constant 0 : index
    %41 = vector.load %arg8[%c56, %c0_19] : memref<88x256xf32, #tpu.memory_space<vmem>>, vector<8x256xf32>
    tpu.vector_store %arg8[%c56, %c0_19], %40 {strides = array<i32>} : memref<88x256xf32, #tpu.memory_space<vmem>>, vector<8x256xf32>,
    %c239_i32 = arith.constant 239 : i32
    %42 = tpu.dynamic_rotate %2 by %c239_i32 dim 1 : vector<8x256xf32>, i32 -> vector<8x256xf32>
    %c8_20 = arith.constant 8 : index
    %c0_21 = arith.constant 0 : index
    %43 = vector.load %arg2[%c8_20, %c0_21] : memref<9x256xf32, #tpu.memory_space<vmem>>, vector<1x256xf32>
    %44 = vector.broadcast %43 : vector<1x256xf32> to vector<8x256xf32>
    %45 = arith.mulf %42, %44 : vector<8x256xf32>
    %c64 = arith.constant 64 : index
    %c0_22 = arith.constant 0 : index
    %46 = vector.load %arg8[%c64, %c0_22] : memref<88x256xf32, #tpu.memory_space<vmem>>, vector<8x256xf32>
    tpu.vector_store %arg8[%c64, %c0_22], %45 {strides = array<i32>} : memref<88x256xf32, #tpu.memory_space<vmem>>, vector<8x256xf32>,
    %c72 = arith.constant 72 : index
    %c0_23 = arith.constant 0 : index
    %47 = vector.load %arg8[%c72, %c0_23] : memref<88x256xf32, #tpu.memory_space<vmem>>, vector<16x256xf32>
    tpu.vector_store %arg8[%c72, %c0_23], %1 {strides = array<i32>} : memref<88x256xf32, #tpu.memory_space<vmem>>, vector<16x256xf32>,
    %c0_24 = arith.constant 0 : index
    %c0_25 = arith.constant 0 : index
    %48 = vector.load %arg8[%c0_24, %c0_25] : memref<88x256xf32, #tpu.memory_space<vmem>>, vector<88x256xf32>
    %c0_26 = arith.constant 0 : index
    %c0_27 = arith.constant 0 : index
    %49 = vector.load %arg3[%c0_26, %c0_27] : memref<64x88xf32, #tpu.memory_space<vmem>>, vector<64x88xf32>
    %c0_28 = arith.constant 0 : index
    %c0_29 = arith.constant 0 : index
    %50 = vector.load %arg5[%c0_28, %c0_29] : memref<16x32xf32, #tpu.memory_space<vmem>>, vector<16x32xf32>
    %cst = arith.constant dense<0.000000e+00> : vector<64x256xf32>
    %51 = tpu.matmul %49, %48, %cst {dimension_numbers = #tpu.dot_dimension_numbers<[1], [0], [0], [1], [0, 0, 1, 1], [], []>} : vector<64x88xf32>, vector<88x256xf32>, vector<64x256xf32> -> vector<64x256xf32>
    %c0_30 = arith.constant 0 : index
    %c0_31 = arith.constant 0 : index
    %52 = vector.load %arg4[%c0_30, %c0_31] : memref<64x1xf32, #tpu.memory_space<vmem>>, vector<64x1xf32>
    %53 = vector.broadcast %52 : vector<64x1xf32> to vector<64x256xf32>
    %54 = arith.addf %51, %53 : vector<64x256xf32>
    %55 = vector.extract_strided_slice %54 {offsets = [0, 0], sizes = [32, 256], strides = [1, 1]} : vector<64x256xf32> to vector<32x256xf32>
    %56 = vector.extract_strided_slice %54 {offsets = [32, 0], sizes = [32, 256], strides = [1, 1]} : vector<64x256xf32> to vector<32x256xf32>
    %cst_32 = arith.constant 5.000000e-01 : f32
    %57 = vector.broadcast %cst_32 : f32 to vector<32x256xf32>
    %58 = arith.mulf %57, %55 : vector<32x256xf32>
    %cst_33 = arith.constant 0.707106769 : f32
    %59 = vector.broadcast %cst_33 : f32 to vector<32x256xf32>
    %60 = arith.mulf %55, %59 : vector<32x256xf32>
    %61 = math.erf %60 : vector<32x256xf32>
    %cst_34 = arith.constant 1.000000e+00 : f32
    %62 = vector.broadcast %cst_34 : f32 to vector<32x256xf32>
    %63 = arith.addf %62, %61 : vector<32x256xf32>
    %64 = arith.mulf %58, %63 : vector<32x256xf32>
    %65 = arith.mulf %64, %56 : vector<32x256xf32>
    %cst_35 = arith.constant dense<0.000000e+00> : vector<16x256xf32>
    %66 = tpu.matmul %50, %65, %cst_35 {dimension_numbers = #tpu.dot_dimension_numbers<[1], [0], [0], [1], [0, 0, 1, 1], [], []>} : vector<16x32xf32>, vector<32x256xf32>, vector<16x256xf32> -> vector<16x256xf32>
    %c0_36 = arith.constant 0 : index
    %c0_37 = arith.constant 0 : index
    %67 = vector.load %arg6[%c0_36, %c0_37] : memref<16x1xf32, #tpu.memory_space<vmem>>, vector<16x1xf32>
    %68 = vector.broadcast %67 : vector<16x1xf32> to vector<16x256xf32>
    %69 = arith.addf %66, %68 : vector<16x256xf32>
    %c0_38 = arith.constant 0 : index
    %c0_39 = arith.constant 0 : index
    %c0_40 = arith.constant 0 : index
    %70 = vector.load %arg7[%c0_38, %c0_39, %c0_40] : memref<1x16x256xf32, #tpu.memory_space<vmem>>, vector<1x16x256xf32>
    %71 = vector.shape_cast %70 : vector<1x16x256xf32> to vector<16x256xf32>
    %72 = vector.shape_cast %69 : vector<16x256xf32> to vector<1x16x256xf32>
    tpu.vector_store %arg7[%c0_38, %c0_39, %c0_40], %72 {strides = array<i32>} : memref<1x16x256xf32, #tpu.memory_space<vmem>>, vector<1x16x256xf32>,
    return
  }
  func.func @transform_0(%arg0: i32) -> (i32, i32, i32) {
    %c0_i32 = arith.constant 0 : i32
    %c0_i32_0 = arith.constant 0 : i32
    %c0_i32_1 = arith.constant 0 : i32
    return %arg0, %c0_i32, %c0_i32_0 : i32, i32, i32
  }
  func.func @transform_1(%arg0: i32) -> (i32, i32) {
    %c0_i32 = arith.constant 0 : i32
    %c0_i32_0 = arith.constant 0 : i32
    %c0_i32_1 = arith.constant 0 : i32
    return %c0_i32, %c0_i32_0 : i32, i32
  }
  func.func @transform_2(%arg0: i32) -> (i32, i32) {
    %c0_i32 = arith.constant 0 : i32
    %c0_i32_0 = arith.constant 0 : i32
    %c0_i32_1 = arith.constant 0 : i32
    return %c0_i32, %c0_i32_0 : i32, i32
  }
  func.func @transform_3(%arg0: i32) -> (i32, i32) {
    %c0_i32 = arith.constant 0 : i32
    %c0_i32_0 = arith.constant 0 : i32
    %c0_i32_1 = arith.constant 0 : i32
    return %c0_i32, %c0_i32_0 : i32, i32
  }
  func.func @transform_4(%arg0: i32) -> (i32, i32) {
    %c0_i32 = arith.constant 0 : i32
    %c0_i32_0 = arith.constant 0 : i32
    %c0_i32_1 = arith.constant 0 : i32
    return %c0_i32, %c0_i32_0 : i32, i32
  }
  func.func @transform_5(%arg0: i32) -> (i32, i32) {
    %c0_i32 = arith.constant 0 : i32
    %c0_i32_0 = arith.constant 0 : i32
    %c0_i32_1 = arith.constant 0 : i32
    return %c0_i32, %c0_i32_0 : i32, i32
  }
  func.func @transform_6(%arg0: i32) -> (i32, i32, i32) {
    %c0_i32 = arith.constant 0 : i32
    %c0_i32_0 = arith.constant 0 : i32
    %c0_i32_1 = arith.constant 0 : i32
    return %arg0, %c0_i32, %c0_i32_0 : i32, i32, i32
  }
}

</mosaic_0001>

<llo_original>
// kernel: feedforward.1
$region0: #{feedforward.1}
  #allocation0 [shape = 'u32[]', space=smem, size = 0x4, offset = 0x4, fixed_abs, tag = 'smem constant byte address 0x4 - core index']
  #allocation1 [shape = 'u32[144,128]{1,0:T(1,128)}', space=vmem, size = 0x12000, scoped, tag = 'internal scratch']
  #allocation2 [shape = 'f32[88,256]{1,0:T(8,128)}', space=vmem, size = 0x16000, scoped, tag = 'scratch operand']
  %s0 = inlined_call_operand.vmem [shape: f32[2,16,256], index: 0, kind: input, shape index: {}]
  %s1 = inlined_call_operand.vmem [shape: f32[9,256], index: 1, kind: input, shape index: {}]
  %s2 = inlined_call_operand.vmem [shape: f32[64,88], index: 2, kind: input, shape index: {}]
  %s3 = inlined_call_operand.vmem [shape: f32[64,1], index: 3, kind: input, shape index: {}]
  %s4 = inlined_call_operand.vmem [shape: f32[16,32], index: 4, kind: input, shape index: {}]
  %s5 = inlined_call_operand.vmem [shape: f32[16,1], index: 5, kind: input, shape index: {}]
  %s6 = inlined_call_operand.vmem [shape: f32[2,16,256], index: 6, kind: output, shape index: {}]
  %s7 = sld [smem:[#allocation0]]
  $region57: #{feedforward.1} parent=0
    _
  %s9 = ssub.s32 1, %s7
  %s10 = scalar_select 0, %s9, %s7
  loop: start=0, step=1, limit=4
  $region2: #{feedforward.1} parent=0 // loop_pre_header
    _
  $region3: #{feedforward.1} parent=0 // loop_header
    %s12 = sphi 0, %s16
    %p13 = scmp.ge.s32.totalorder %s12, 4
    %s22 = sphi 0, %s24
    %s25 = sphi 0, %s22
    %s26 = sphi 0, %s25
    %s42 = sphi 0, %s26
    %s46 = sphi 0, %s46
    %s48 = sphi 0, %s46
    %s49 = sphi 0, %s48
    %s63 = sphi 0, %s49
    %s67 = sphi 0, %s67
    %s69 = sphi 0, %s67
    %s70 = sphi 0, %s69
    %s84 = sphi 0, %s70
    %s88 = sphi 0, %s88
    %s90 = sphi 0, %s88
    %s91 = sphi 0, %s90
    %s105 = sphi 0, %s91
    %s109 = sphi 0, %s109
    %s111 = sphi 0, %s109
    %s112 = sphi 0, %s111
    %s126 = sphi 0, %s112
    %s130 = sphi 0, %s130
    %s132 = sphi 0, %s130
    %s133 = sphi 0, %s132
    %s147 = sphi 0, %s133
    %s153 = sphi 0, %s155
    %s156 = sphi 0, %s153
    %s157 = sphi 0, %s156
    %s173 = sphi 0, %s157
  $region4: #{feedforward.1} parent=0 // loop_header_branch
    %15 = sbr.rel (%p13) target = $region8
  $region5: #{feedforward.1} parent=0 // loop_body
    %s17 = ssub.s32 %s12, 1
    %s18 = ssub.s32 %s12, 2
    %s19 = sadd.s32 %s12, 1
    %s20 = ssub.s32 %s12, %s19
    %p21 = scmp.eq.s32.totalorder %s20, 0
    %s23 = sadd.s32 %s22, 1
    %s24 = scalar_select %p21, %s22, %s23
    %p27 = pneg %p21
    %p28 = scmp.eq.s32.totalorder %s12, 1
    %p29 = por %p27, %p28
    %p30 = scmp.ne.s32.totalorder %s22, %s25
    %p31 = scmp.eq.s32.totalorder %s12, 0
    %p32 = por %p30, %p31
    %p33 = scmp.ne.s32.totalorder %s22, %s25
    %p34 = scmp.eq.s32.totalorder %s17, 1
    %p35 = por %p33, %p34
    %p36 = scmp.ne.s32.totalorder %s25, %s26
    %p37 = scmp.eq.s32.totalorder %s17, 0
    %p38 = por %p36, %p37
    %p39 = scmp.ne.s32.totalorder %s25, %s26
    %p40 = scmp.eq.s32.totalorder %s18, 1
    %p41 = por %p39, %p40
    %p43 = scmp.ne.s32.totalorder %s26, %s42
    %p44 = scmp.eq.s32.totalorder %s18, 0
    %p45 = por %p43, %p44
    %s47 = sadd.s32 %s46, 1
    %p50 = scmp.eq.s32.totalorder %s12, 1
    %p51 = scmp.ne.s32.totalorder %s46, %s48
    %p52 = scmp.eq.s32.totalorder %s12, 0
    %p53 = por %p51, %p52
    %p54 = scmp.ne.s32.totalorder %s46, %s48
    %p55 = scmp.eq.s32.totalorder %s17, 1
    %p56 = por %p54, %p55
    %p57 = scmp.ne.s32.totalorder %s48, %s49
    %p58 = scmp.eq.s32.totalorder %s17, 0
    %p59 = por %p57, %p58
    %p60 = scmp.ne.s32.totalorder %s48, %s49
    %p61 = scmp.eq.s32.totalorder %s18, 1
    %p62 = por %p60, %p61
    %p64 = scmp.ne.s32.totalorder %s49, %s63
    %p65 = scmp.eq.s32.totalorder %s18, 0
    %p66 = por %p64, %p65
    %s68 = sadd.s32 %s67, 1
    %p71 = scmp.eq.s32.totalorder %s12, 1
    %p72 = scmp.ne.s32.totalorder %s67, %s69
    %p73 = scmp.eq.s32.totalorder %s12, 0
    %p74 = por %p72, %p73
    %p75 = scmp.ne.s32.totalorder %s67, %s69
    %p76 = scmp.eq.s32.totalorder %s17, 1
    %p77 = por %p75, %p76
    %p78 = scmp.ne.s32.totalorder %s69, %s70
    %p79 = scmp.eq.s32.totalorder %s17, 0
    %p80 = por %p78, %p79
    %p81 = scmp.ne.s32.totalorder %s69, %s70
    %p82 = scmp.eq.s32.totalorder %s18, 1
    %p83 = por %p81, %p82
    %p85 = scmp.ne.s32.totalorder %s70, %s84
    %p86 = scmp.eq.s32.totalorder %s18, 0
    %p87 = por %p85, %p86
    %s89 = sadd.s32 %s88, 1
    %p92 = scmp.eq.s32.totalorder %s12, 1
    %p93 = scmp.ne.s32.totalorder %s88, %s90
    %p94 = scmp.eq.s32.totalorder %s12, 0
    %p95 = por %p93, %p94
    %p96 = scmp.ne.s32.totalorder %s88, %s90
    %p97 = scmp.eq.s32.totalorder %s17, 1
    %p98 = por %p96, %p97
    %p99 = scmp.ne.s32.totalorder %s90, %s91
    %p100 = scmp.eq.s32.totalorder %s17, 0
    %p101 = por %p99, %p100
    %p102 = scmp.ne.s32.totalorder %s90, %s91
    %p103 = scmp.eq.s32.totalorder %s18, 1
    %p104 = por %p102, %p103
    %p106 = scmp.ne.s32.totalorder %s91, %s105
    %p107 = scmp.eq.s32.totalorder %s18, 0
    %p108 = por %p106, %p107
    %s110 = sadd.s32 %s109, 1
    %p113 = scmp.eq.s32.totalorder %s12, 1
    %p114 = scmp.ne.s32.totalorder %s109, %s111
    %p115 = scmp.eq.s32.totalorder %s12, 0
    %p116 = por %p114, %p115
    %p117 = scmp.ne.s32.totalorder %s109, %s111
    %p118 = scmp.eq.s32.totalorder %s17, 1
    %p119 = por %p117, %p118
    %p120 = scmp.ne.s32.totalorder %s111, %s112
    %p121 = scmp.eq.s32.totalorder %s17, 0
    %p122 = por %p120, %p121
    %p123 = scmp.ne.s32.totalorder %s111, %s112
    %p124 = scmp.eq.s32.totalorder %s18, 1
    %p125 = por %p123, %p124
    %p127 = scmp.ne.s32.totalorder %s112, %s126
    %p128 = scmp.eq.s32.totalorder %s18, 0
    %p129 = por %p127, %p128
    %s131 = sadd.s32 %s130, 1
    %p134 = scmp.eq.s32.totalorder %s12, 1
    %p135 = scmp.ne.s32.totalorder %s130, %s132
    %p136 = scmp.eq.s32.totalorder %s12, 0
    %p137 = por %p135, %p136
    %p138 = scmp.ne.s32.totalorder %s130, %s132
    %p139 = scmp.eq.s32.totalorder %s17, 1
    %p140 = por %p138, %p139
    %p141 = scmp.ne.s32.totalorder %s132, %s133
    %p142 = scmp.eq.s32.totalorder %s17, 0
    %p143 = por %p141, %p142
    %p144 = scmp.ne.s32.totalorder %s132, %s133
    %p145 = scmp.eq.s32.totalorder %s18, 1
    %p146 = por %p144, %p145
    %p148 = scmp.ne.s32.totalorder %s133, %s147
    %p149 = scmp.eq.s32.totalorder %s18, 0
    %p150 = por %p148, %p149
    %s151 = ssub.s32 %s12, %s19
    %p152 = scmp.eq.s32.totalorder %s151, 0
    %s154 = sadd.s32 %s153, 1
    %s155 = scalar_select %p152, %s153, %s154
    %p158 = pneg %p152
    %p159 = scmp.eq.s32.totalorder %s12, 1
    %p160 = por %p158, %p159
    %p161 = scmp.ne.s32.totalorder %s153, %s156
    %p162 = scmp.eq.s32.totalorder %s12, 0
    %p163 = por %p161, %p162
    %p164 = scmp.ne.s32.totalorder %s153, %s156
    %p165 = scmp.eq.s32.totalorder %s17, 1
    %p166 = por %p164, %p165
    %p167 = scmp.ne.s32.totalorder %s156, %s157
    %p168 = scmp.eq.s32.totalorder %s17, 0
    %p169 = por %p167, %p168
    %p170 = scmp.ne.s32.totalorder %s156, %s157
    %p171 = scmp.eq.s32.totalorder %s18, 1
    %p172 = por %p170, %p171
    %p174 = scmp.ne.s32.totalorder %s157, %s173
    %p175 = scmp.eq.s32.totalorder %s18, 0
    %p176 = por %p174, %p175
    %p177 = scmp.le.s32.totalorder 1, %s12
    %p178 = scmp.lt.s32.totalorder %s12, 3
    %p179 = pnand %p177, %p178
    %p180 = pneg %p179
    // Predicated region
    $region9: #{feedforward.1} parent=5 // pred_check
      _
    $region10: #{feedforward.1} parent=5 // pred_check_branch
      %182 = sbr.rel (%p179) target = $region12
    $region11: #{feedforward.1} parent=5 // pred_region
      %s183 = ssub.s32 %s12, 1
      // Predicated region
      $region13: #{feedforward.1} parent=11 // pred_check
        %p184 = pneg %p59
      $region14: #{feedforward.1} parent=11 // pred_check_branch
        %186 = sbr.rel (%p184) target = $region16
      $region15: #{feedforward.1} parent=11 // pred_region
        _
      $region16: #{feedforward.1} parent=11 // pred_fallthru
        _
      // Predicated region
      $region17: #{feedforward.1} parent=11 // pred_check
        %p187 = pneg %p80
      $region18: #{feedforward.1} parent=11 // pred_check_branch
        %189 = sbr.rel (%p187) target = $region20
      $region19: #{feedforward.1} parent=11 // pred_region
        _
      $region20: #{feedforward.1} parent=11 // pred_fallthru
        _
      // Predicated region
      $region21: #{feedforward.1} parent=11 // pred_check
        %p190 = pneg %p101
      $region22: #{feedforward.1} parent=11 // pred_check_branch
        %192 = sbr.rel (%p190) target = $region24
      $region23: #{feedforward.1} parent=11 // pred_region
        _
      $region24: #{feedforward.1} parent=11 // pred_fallthru
        _
      // Predicated region
      $region25: #{feedforward.1} parent=11 // pred_check
        %p193 = pneg %p122
      $region26: #{feedforward.1} parent=11 // pred_check_branch
        %195 = sbr.rel (%p193) target = $region28
      $region27: #{feedforward.1} parent=11 // pred_region
        _
      $region28: #{feedforward.1} parent=11 // pred_fallthru
        _
      // Predicated region
      $region29: #{feedforward.1} parent=11 // pred_check
        %p196 = pneg %p143
      $region30: #{feedforward.1} parent=11 // pred_check_branch
        %198 = sbr.rel (%p196) target = $region32
      $region31: #{feedforward.1} parent=11 // pred_region
        _
      $region32: #{feedforward.1} parent=11 // pred_fallthru
        _
    $region12: #{feedforward.1} parent=5 // pred_fallthru
      _
    %p199 = scmp.lt.s32.totalorder %s12, 2
    // Predicated region
    $region33: #{feedforward.1} parent=5 // pred_check
      %p200 = pneg %p199
    $region34: #{feedforward.1} parent=5 // pred_check_branch
      %202 = sbr.rel (%p200) target = $region36
    $region35: #{feedforward.1} parent=5 // pred_region
      // Predicated region
      $region37: #{feedforward.1} parent=35 // pred_check
        %p203 = pneg %p32
      $region38: #{feedforward.1} parent=35 // pred_check_branch
        %205 = sbr.rel (%p203) target = $region40
      $region39: #{feedforward.1} parent=35 // pred_region
        %p206 = scmp.lt.s32.totalorder %s12, 1
        %s207 = scalar_select %p206, %s12, 1
        %s208 = smul.addr %s207, 4
        %s209 = smul.addr %s208, 8
        %s210 = scalar_lea.vmem %s0, %s209
      $region40: #{feedforward.1} parent=35 // pred_fallthru
        _
    $region36: #{feedforward.1} parent=5 // pred_fallthru
      _
    %p211 = scmp.le.s32.totalorder 1, %s12
    %p212 = scmp.lt.s32.totalorder %s12, 3
    %p213 = pnand %p211, %p212
    %p214 = pneg %p213
    // Predicated region
    $region41: #{feedforward.1} parent=5 // pred_check
      _
    $region42: #{feedforward.1} parent=5 // pred_check_branch
      %216 = sbr.rel (%p213) target = $region44
    $region43: #{feedforward.1} parent=5 // pred_region
      %s217 = ssub.s32 %s12, 1
      %p218 = scmp.lt.s32.totalorder %s17, 1
      %s219 = scalar_select %p218, %s17, 1
      %s220 = smul.addr %s219, 4
      %s221 = smul.addr %s220, 8
      %s222 = scalar_lea.vmem %s0, %s221
      %p223 = pneg %p38
      %p224 = pneg %p35
      %p225 = pneg %p59
      %p226 = pneg %p56
      %p227 = pneg %p80
      %p228 = pneg %p77
      %p229 = pneg %p101
      %p230 = pneg %p98
      %p231 = pneg %p122
      %p232 = pneg %p119
      %p233 = pneg %p143
      %p234 = pneg %p140
      %p235 = pneg %p169
      %p236 = pneg %p166
      %p237 = scmp.lt.s32.totalorder %s17, 1
      %s238 = scalar_select %p237, %s17, 1
      %s239 = smul.addr %s238, 4
      %s240 = smul.addr %s239, 8
      %s241 = scalar_lea.vmem %s6, %s240
      %p242 = scmp.lt.s32.totalorder %s17, 1
      %s243 = scalar_select %p242, %s17, 1
      %s244 = smul.addr %s243, 4
      %s245 = smul.addr %s244, 8
      %s246 = scalar_lea.vmem %s0, %s245
      %p247 = scmp.lt.s32.totalorder %s17, 1
      %s248 = scalar_select %p247, %s17, 1
      %s249 = smul.addr %s248, 4
      %s250 = smul.addr %s249, 8
      %s251 = scalar_lea.vmem %s6, %s250
      %v252 = vld [vmem:[%s246] sm:$0xff]
      %v253 = vld [vmem:[%s246 + $0x8] sm:$0xff]
      %v254 = vld [vmem:[%s246 + $0x10] sm:$0xff]
      %v255 = vld [vmem:[%s246 + $0x18] sm:$0xff]
      %256 = vrot.lane.b32.xlu0 %v252, 17
      %v257 = vpop.permute.xlu0 %256
      %258 = vrot.lane.b32.xlu0 %v253, 17
      %v259 = vpop.permute.xlu0 %258
      %v260 = vlaneseq
      %v261 = vand.u32 %v260, 127
      %vm262 = vcmp.lt.s32.totalorder %v261, 17
      %v263 = vsel %vm262, %v257, %v259
      %v264 = vsel %vm262, %v259, %v257
      %v265 = vld [vmem:[%s1] ss:$8 sm:$0x3]
      %v267 = vlaneseq
      %v268 = vshrl.u32 %v267, 7
      %v269 = vsub.s32 0, %v268
      %v270 = vrot.slane %v265, %v269
      %v271 = vlaneseq
      %v272 = vshrl.u32 %v271, 7
      %v273 = vsub.s32 1, %v272
      %v274 = vrot.slane %v265, %v273
      %v277 = vmul.f32 %v264, %v270
      %v278 = vmul.f32 %v263, %v274
      %279 = vst [vmem:[#allocation2] sm:$0xff] %v277
      %280 = vst [vmem:[#allocation2 + $0x8] sm:$0xff] %v278
      %281 = vrot.lane.b32.xlu0 %v252, 16
      %v282 = vpop.permute.xlu0 %281
      %283 = vrot.lane.b32.xlu0 %v253, 16
      %v284 = vpop.permute.xlu0 %283
      %vm285 = vcmp.lt.s32.totalorder %v261, 16
      %v286 = vsel %vm285, %v282, %v284
      %v287 = vsel %vm285, %v284, %v282
      %s288 = scalar_lea.vmem %s1, 1
      %v289 = vld [vmem:[%s288] ss:$8 sm:$0x3]
      %v291 = vlaneseq
      %v292 = vshrl.u32 %v291, 7
      %v293 = vsub.s32 0, %v292
      %v294 = vrot.slane %v289, %v293
      %v295 = vlaneseq
      %v296 = vshrl.u32 %v295, 7
      %v297 = vsub.s32 1, %v296
      %v298 = vrot.slane %v289, %v297
      %v301 = vmul.f32 %v287, %v294
      %v302 = vmul.f32 %v286, %v298
      %303 = vst [vmem:[#allocation2 + $0x10] sm:$0xff] %v301
      %304 = vst [vmem:[#allocation2 + $0x18] sm:$0xff] %v302
      %305 = vrot.lane.b32.xlu0 %v252, 15
      %v306 = vpop.permute.xlu0 %305
      %307 = vrot.lane.b32.xlu0 %v253, 15
      %v308 = vpop.permute.xlu0 %307
      %vm309 = vcmp.lt.s32.totalorder %v261, 15
      %v310 = vsel %vm309, %v306, %v308
      %v311 = vsel %vm309, %v308, %v306
      %s312 = scalar_lea.vmem %s1, 2
      %v313 = vld [vmem:[%s312] ss:$8 sm:$0x3]
      %v315 = vlaneseq
      %v316 = vshrl.u32 %v315, 7
      %v317 = vsub.s32 0, %v316
      %v318 = vrot.slane %v313, %v317
      %v319 = vlaneseq
      %v320 = vshrl.u32 %v319, 7
      %v321 = vsub.s32 1, %v320
      %v322 = vrot.slane %v313, %v321
      %v325 = vmul.f32 %v311, %v318
      %v326 = vmul.f32 %v310, %v322
      %327 = vst [vmem:[#allocation2 + $0x20] sm:$0xff] %v325
      %328 = vst [vmem:[#allocation2 + $0x28] sm:$0xff] %v326
      %329 = vrot.lane.b32.xlu0 %v252, 1
      %v330 = vpop.permute.xlu0 %329
      %331 = vrot.lane.b32.xlu0 %v253, 1
      %v332 = vpop.permute.xlu0 %331
      %vm333 = vcmp.lt.s32.totalorder %v261, 1
      %v334 = vsel %vm333, %v330, %v332
      %v335 = vsel %vm333, %v332, %v330
      %s336 = scalar_lea.vmem %s1, 3
      %v337 = vld [vmem:[%s336] ss:$8 sm:$0x3]
      %v339 = vlaneseq
      %v340 = vshrl.u32 %v339, 7
      %v341 = vsub.s32 0, %v340
      %v342 = vrot.slane %v337, %v341
      %v343 = vlaneseq
      %v344 = vshrl.u32 %v343, 7
      %v345 = vsub.s32 1, %v344
      %v346 = vrot.slane %v337, %v345
      %v349 = vmul.f32 %v335, %v342
      %v350 = vmul.f32 %v334, %v346
      %351 = vst [vmem:[#allocation2 + $0x30] sm:$0xff] %v349
      %352 = vst [vmem:[#allocation2 + $0x38] sm:$0xff] %v350
      %s353 = scalar_lea.vmem %s1, 4
      %v354 = vld [vmem:[%s353] ss:$8 sm:$0x3]
      %v356 = vlaneseq
      %v357 = vshrl.u32 %v356, 7
      %v358 = vsub.s32 0, %v357
      %v359 = vrot.slane %v354, %v358
      %v360 = vlaneseq
      %v361 = vshrl.u32 %v360, 7
      %v362 = vsub.s32 1, %v361
      %v363 = vrot.slane %v354, %v362
      %v366 = vmul.f32 %v252, %v359
      %v367 = vmul.f32 %v253, %v363
      %368 = vst [vmem:[#allocation2 + $0x40] sm:$0xff] %v366
      %369 = vst [vmem:[#allocation2 + $0x48] sm:$0xff] %v367
      %370 = vrot.lane.b32.xlu0 %v252, 127
      %v371 = vpop.permute.xlu0 %370
      %372 = vrot.lane.b32.xlu0 %v253, 127
      %v373 = vpop.permute.xlu0 %372
      %vm374 = vcmp.lt.s32.totalorder %v261, 127
      %v375 = vsel %vm374, %v371, %v373
      %v376 = vsel %vm374, %v373, %v371
      %s377 = scalar_lea.vmem %s1, 5
      %v378 = vld [vmem:[%s377] ss:$8 sm:$0x3]
      %v380 = vlaneseq
      %v381 = vshrl.u32 %v380, 7
      %v382 = vsub.s32 0, %v381
      %v383 = vrot.slane %v378, %v382
      %v384 = vlaneseq
      %v385 = vshrl.u32 %v384, 7
      %v386 = vsub.s32 1, %v385
      %v387 = vrot.slane %v378, %v386
      %v390 = vmul.f32 %v375, %v383
      %v391 = vmul.f32 %v376, %v387
      %392 = vst [vmem:[#allocation2 + $0x50] sm:$0xff] %v390
      %393 = vst [vmem:[#allocation2 + $0x58] sm:$0xff] %v391
      %394 = vrot.lane.b32.xlu0 %v252, 113
      %v395 = vpop.permute.xlu0 %394
      %396 = vrot.lane.b32.xlu0 %v253, 113
      %v397 = vpop.permute.xlu0 %396
      %vm398 = vcmp.lt.s32.totalorder %v261, 113
      %v399 = vsel %vm398, %v395, %v397
      %v400 = vsel %vm398, %v397, %v395
      %s401 = scalar_lea.vmem %s1, 6
      %v402 = vld [vmem:[%s401] ss:$8 sm:$0x3]
      %v404 = vlaneseq
      %v405 = vshrl.u32 %v404, 7
      %v406 = vsub.s32 0, %v405
      %v407 = vrot.slane %v402, %v406
      %v408 = vlaneseq
      %v409 = vshrl.u32 %v408, 7
      %v410 = vsub.s32 1, %v409
      %v411 = vrot.slane %v402, %v410
      %v414 = vmul.f32 %v399, %v407
      %v415 = vmul.f32 %v400, %v411
      %416 = vst [vmem:[#allocation2 + $0x60] sm:$0xff] %v414
      %417 = vst [vmem:[#allocation2 + $0x68] sm:$0xff] %v415
      %418 = vrot.lane.b32.xlu0 %v252, 112
      %v419 = vpop.permute.xlu0 %418
      %420 = vrot.lane.b32.xlu0 %v253, 112
      %v421 = vpop.permute.xlu0 %420
      %vm422 = vcmp.lt.s32.totalorder %v261, 112
      %v423 = vsel %vm422, %v419, %v421
      %v424 = vsel %vm422, %v421, %v419
      %s425 = scalar_lea.vmem %s1, 7
      %v426 = vld [vmem:[%s425] ss:$8 sm:$0x3]
      %v428 = vlaneseq
      %v429 = vshrl.u32 %v428, 7
      %v430 = vsub.s32 0, %v429
      %v431 = vrot.slane %v426, %v430
      %v432 = vlaneseq
      %v433 = vshrl.u32 %v432, 7
      %v434 = vsub.s32 1, %v433
      %v435 = vrot.slane %v426, %v434
      %v438 = vmul.f32 %v423, %v431
      %v439 = vmul.f32 %v424, %v435
      %440 = vst [vmem:[#allocation2 + $0x70] sm:$0xff] %v438
      %441 = vst [vmem:[#allocation2 + $0x78] sm:$0xff] %v439
      %442 = vrot.lane.b32.xlu0 %v252, 111
      %v443 = vpop.permute.xlu0 %442
      %444 = vrot.lane.b32.xlu0 %v253, 111
      %v445 = vpop.permute.xlu0 %444
      %vm446 = vcmp.lt.s32.totalorder %v261, 111
      %v447 = vsel %vm446, %v443, %v445
      %v448 = vsel %vm446, %v445, %v443
      %s449 = scalar_lea.vmem %s1, 16
      %v450 = vld [vmem:[%s449] ss:$8 sm:$0x3]
      %v452 = vlaneseq
      %v453 = vshrl.u32 %v452, 7
      %v454 = vsub.s32 0, %v453
      %v455 = vrot.slane %v450, %v454
      %v456 = vlaneseq
      %v457 = vshrl.u32 %v456, 7
      %v458 = vsub.s32 1, %v457
      %v459 = vrot.slane %v450, %v458
      %v462 = vmul.f32 %v447, %v455
      %v463 = vmul.f32 %v448, %v459
      %464 = vst [vmem:[#allocation2 + $0x80] sm:$0xff] %v462
      %465 = vst [vmem:[#allocation2 + $0x88] sm:$0xff] %v463
      %466 = vst [vmem:[#allocation2 + $0x90] sm:$0xff] %v252
      %467 = vst [vmem:[#allocation2 + $0x98] sm:$0xff] %v253
      %468 = vst [vmem:[#allocation2 + $0xa0] sm:$0xff] %v254
      %469 = vst [vmem:[#allocation2 + $0xa8] sm:$0xff] %v255
      %v470 = vld [vmem:[#allocation2] sm:$0xff]
      %v471 = vld [vmem:[#allocation2 + $0x8] sm:$0xff]
      %v472 = vld [vmem:[#allocation2 + $0x10] sm:$0xff]
      %v473 = vld [vmem:[#allocation2 + $0x18] sm:$0xff]
      %v474 = vld [vmem:[#allocation2 + $0x20] sm:$0xff]
      %v475 = vld [vmem:[#allocation2 + $0x28] sm:$0xff]
      %v476 = vld [vmem:[#allocation2 + $0x30] sm:$0xff]
      %v477 = vld [vmem:[#allocation2 + $0x38] sm:$0xff]
      %v478 = vld [vmem:[#allocation2 + $0x40] sm:$0xff]
      %v479 = vld [vmem:[#allocation2 + $0x48] sm:$0xff]
      %v480 = vld [vmem:[#allocation2 + $0x50] sm:$0xff]
      %v481 = vld [vmem:[#allocation2 + $0x58] sm:$0xff]
      %v482 = vld [vmem:[#allocation2 + $0x60] sm:$0xff]
      %v483 = vld [vmem:[#allocation2 + $0x68] sm:$0xff]
      %v484 = vld [vmem:[#allocation2 + $0x70] sm:$0xff]
      %v485 = vld [vmem:[#allocation2 + $0x78] sm:$0xff]
      %v486 = vld [vmem:[#allocation2 + $0x80] sm:$0xff]
      %v487 = vld [vmem:[#allocation2 + $0x88] sm:$0xff]
      %v488 = vld [vmem:[#allocation2 + $0x90] sm:$0xff]
      %v489 = vld [vmem:[#allocation2 + $0x98] sm:$0xff]
      %v490 = vld [vmem:[#allocation2 + $0xa0] sm:$0xff]
      %v491 = vld [vmem:[#allocation2 + $0xa8] sm:$0xff]
      %v492 = vld [vmem:[%s2] sm:$0xff]
      %v493 = vld [vmem:[%s2 + $0x8] sm:$0xff]
      %v494 = vld [vmem:[%s2 + $0x10] sm:$0xff]
      %v495 = vld [vmem:[%s2 + $0x18] sm:$0xff]
      %v496 = vld [vmem:[%s2 + $0x20] sm:$0xff]
      %v497 = vld [vmem:[%s2 + $0x28] sm:$0xff]
      %v498 = vld [vmem:[%s2 + $0x30] sm:$0xff]
      %v499 = vld [vmem:[%s2 + $0x38] sm:$0xff]
      %v500 = vld [vmem:[%s4] sm:$0xff]
      %v501 = vld [vmem:[%s4 + $0x8] sm:$0xff]
      %v502 = vld [vmem:[%s3] sm:$0xff]
      %v503 = vld [vmem:[%s3 + $0x8] sm:$0xff]
      %v504 = vld [vmem:[%s3 + $0x10] sm:$0xff]
      %v505 = vld [vmem:[%s3 + $0x18] sm:$0xff]
      %v506 = vld [vmem:[%s3 + $0x20] sm:$0xff]
      %v507 = vld [vmem:[%s3 + $0x28] sm:$0xff]
      %v508 = vld [vmem:[%s3 + $0x30] sm:$0xff]
      %v509 = vld [vmem:[%s3 + $0x38] sm:$0xff]
      %511 = vset.pattern.permute.xlu0 0
      %512 = vperm.xlu0 %511, %v502
      %v513 = vpop.permute.xlu0 %512
      %516 = vset.pattern.permute.xlu0 0
      %517 = vperm.xlu0 %516, %v503
      %v518 = vpop.permute.xlu0 %517
      %521 = vset.pattern.permute.xlu0 0
      %522 = vperm.xlu0 %521, %v504
      %v523 = vpop.permute.xlu0 %522
      %526 = vset.pattern.permute.xlu0 0
      %527 = vperm.xlu0 %526, %v505
      %v528 = vpop.permute.xlu0 %527
      %531 = vset.pattern.permute.xlu0 0
      %532 = vperm.xlu0 %531, %v506
      %v533 = vpop.permute.xlu0 %532
      %536 = vset.pattern.permute.xlu0 0
      %537 = vperm.xlu0 %536, %v507
      %v538 = vpop.permute.xlu0 %537
      %541 = vset.pattern.permute.xlu0 0
      %542 = vperm.xlu0 %541, %v508
      %v543 = vpop.permute.xlu0 %542
      %546 = vset.pattern.permute.xlu0 0
      %547 = vperm.xlu0 %546, %v509
      %v548 = vpop.permute.xlu0 %547
      %vm550 = vcmask 719872
      %v552 = vsel %vm550, %v492, 0
      %v555 = vsel %vm550, %v493, 0
      %v558 = vsel %vm550, %v494, 0
      %v561 = vsel %vm550, %v495, 0
      %v564 = vsel %vm550, %v496, 0
      %v567 = vsel %vm550, %v497, 0
      %v570 = vsel %vm550, %v498, 0
      %v573 = vsel %vm550, %v499, 0
      %575 = vmatprep.subr.mxu0 %v471
      %576 = vmatpush1.msra.mxu0 %v470
      %577 = vmatprep.subr.mxu0 %v473
      %578 = vmatpush1.msra.mxu0 %v472
      %579 = vmatprep.subr.mxu0 %v475
      %580 = vmatpush1.msra.mxu0 %v474
      %581 = vmatprep.subr.mxu0 %v477
      %582 = vmatpush1.msra.mxu0 %v476
      %583 = vmatprep.subr.mxu0 %v479
      %584 = vmatpush1.msra.mxu0 %v478
      %585 = vmatprep.subr.mxu0 %v481
      %586 = vmatpush1.msra.mxu0 %v480
      %587 = vmatprep.subr.mxu0 %v483
      %588 = vmatpush1.msra.mxu0 %v482
      %589 = vmatprep.subr.mxu0 %v485
      %590 = vmatpush1.msra.mxu0 %v484
      %591 = vmatprep.subr.mxu0 %v487
      %592 = vmatpush1.msra.mxu0 %v486
      %593 = vmatprep.subr.mxu0 %v489
      %594 = vmatpush1.msra.mxu0 %v488
      %595 = vmatprep.subr.mxu0 %v491
      %596 = vmatpush1.msra.mxu0 %v490
      %597 = vmatprep.subr.mxu0 0.0
      %598 = vmatpush1.msra.mxu0 0.0
      %599 = vmatprep.subr.mxu0 0.0
      %600 = vmatpush1.msra.mxu0 0.0
      %601 = vmatprep.subr.mxu0 0.0
      %602 = vmatpush1.msra.mxu0 0.0
      %603 = vmatprep.subr.mxu0 0.0
      %604 = vmatpush1.msra.mxu0 0.0
      %605 = vmatprep.subr.mxu0 0.0
      %606 = vmatpush1.msra.mxu0 0.0
      %607 = vmatprep.subr.mxu0 0.0
      %608 = vmatpush1.msra.mxu0 0.0
      %609 = vmatprep.subr.mxu0 0.0
      %610 = vmatpush1.msra.mxu0 0.0
      %611 = vmatprep.subr.mxu0 0.0
      %612 = vmatpush1.msra.mxu0 0.0
      %613 = vmatprep.subr.mxu0 0.0
      %614 = vmatpush1.msra.mxu0 0.0
      %615 = vmatprep.subr.mxu0 0.0
      %616 = vmatpush1.msra.mxu0 0.0
      %617 = vmatprep.subr.mxu0 0.0
      %618 = vmatpush1.msra.mxu0 0.0
      %619 = vmatprep.subr.mxu0 0.0
      %620 = vmatpush1.msra.mxu0 0.0
      %621 = vmatprep.subr.mxu0 0.0
      %622 = vmatpush1.msra.mxu0 0.0
      %623 = vmatprep.subr.mxu0 0.0
      %624 = vmatpush1.msra.mxu0 0.0
      %625 = vmatprep.subr.mxu0 0.0
      %626 = vmatpush1.msra.mxu0 0.0
      %627 = vmatprep.subr.mxu0 0.0
      %628 = vmatpush1.msra.mxu0 0.0
      %629 = vmatprep.subr.mxu0 0.0
      %630 = vmatpush1.msra.mxu0 0.0
      %631 = vmatprep.subr.mxu0 0.0
      %632 = vmatpush1.msra.mxu0 0.0
      %633 = vmatprep.subr.mxu0 0.0
      %634 = vmatpush1.msra.mxu0 0.0
      %635 = vmatprep.subr.mxu0 0.0
      %636 = vmatpush1.msra.mxu0 0.0
      %637 = vmatprep.subr.mxu0 0.0
      %638 = vmatpush1.msra.mxu0 0.0
      %639 = vmatprep.mubr.f32.mxu0 0.0
      %640 = vmatmul.mubr.f32.gmra.mrb[0].mxu0 %v552
      %v641 = vpop.f32.mrb[0].mxu0
      %v642 = vadd.f32 %v513, %v641
      %v643 = vpop.f32.mrb[0].mxu0
      %v644 = vadd.f32 %v513, %v643
      %645 = vmatprep.mubr.f32.mxu0 0.0
      %646 = vmatmul.mubr.f32.gmra.mrb[0].mxu0 %v555
      %v647 = vpop.f32.mrb[0].mxu0
      %v648 = vadd.f32 %v518, %v647
      %v649 = vpop.f32.mrb[0].mxu0
      %v650 = vadd.f32 %v518, %v649
      %651 = vmatprep.mubr.f32.mxu0 0.0
      %652 = vmatmul.mubr.f32.gmra.mrb[0].mxu0 %v558
      %v653 = vpop.f32.mrb[0].mxu0
      %v654 = vadd.f32 %v523, %v653
      %v655 = vpop.f32.mrb[0].mxu0
      %v656 = vadd.f32 %v523, %v655
      %657 = vmatprep.mubr.f32.mxu0 0.0
      %658 = vmatmul.mubr.f32.gmra.mrb[0].mxu0 %v561
      %v659 = vpop.f32.mrb[0].mxu0
      %v660 = vadd.f32 %v528, %v659
      %v661 = vpop.f32.mrb[0].mxu0
      %v662 = vadd.f32 %v528, %v661
      %663 = vmatprep.mubr.f32.mxu0 0.0
      %664 = vmatmul.mubr.f32.gmra.mrb[0].mxu0 %v564
      %v665 = vpop.f32.mrb[0].mxu0
      %v666 = vadd.f32 %v533, %v665
      %v667 = vpop.f32.mrb[0].mxu0
      %v668 = vadd.f32 %v533, %v667
      %669 = vmatprep.mubr.f32.mxu0 0.0
      %670 = vmatmul.mubr.f32.gmra.mrb[0].mxu0 %v567
      %v671 = vpop.f32.mrb[0].mxu0
      %v672 = vadd.f32 %v538, %v671
      %v673 = vpop.f32.mrb[0].mxu0
      %v674 = vadd.f32 %v538, %v673
      %675 = vmatprep.mubr.f32.mxu0 0.0
      %676 = vmatmul.mubr.f32.gmra.mrb[0].mxu0 %v570
      %v677 = vpop.f32.mrb[0].mxu0
      %v678 = vadd.f32 %v543, %v677
      %v679 = vpop.f32.mrb[0].mxu0
      %v680 = vadd.f32 %v543, %v679
      %681 = vmatprep.mubr.f32.mxu0 0.0
      %682 = vmatmul.mubr.f32.gmra.mrb[0].mxu0 %v573
      %v683 = vpop.f32.mrb[0].mxu0
      %v684 = vadd.f32 %v548, %v683
      %v685 = vpop.f32.mrb[0].mxu0
      %v686 = vadd.f32 %v548, %v685
      %687 = vdwg.mxu0
      %v688 = vmul.f32 %v642, 0.5
      %v689 = vmul.f32 %v644, 0.5
      %v690 = vmul.f32 %v648, 0.5
      %v691 = vmul.f32 %v650, 0.5
      %v692 = vmul.f32 %v654, 0.5
      %v693 = vmul.f32 %v656, 0.5
      %v694 = vmul.f32 %v660, 0.5
      %v695 = vmul.f32 %v662, 0.5
      %v696 = vmul.f32 %v642, 0.70710677
      %v697 = vmul.f32 %v644, 0.70710677
      %v698 = vmul.f32 %v648, 0.70710677
      %v699 = vmul.f32 %v650, 0.70710677
      %v700 = vmul.f32 %v654, 0.70710677
      %v701 = vmul.f32 %v656, 0.70710677
      %v702 = vmul.f32 %v660, 0.70710677
      %v703 = vmul.f32 %v662, 0.70710677
      %v704 = verf.f32.pop %v696
      %v705 = verf.f32.pop %v697
      %v706 = verf.f32.pop %v698
      %v707 = verf.f32.pop %v699
      %v708 = verf.f32.pop %v700
      %v709 = verf.f32.pop %v701
      %v710 = verf.f32.pop %v702
      %v711 = verf.f32.pop %v703
      %v712 = vadd.f32 %v704, 1.0
      %v713 = vadd.f32 %v705, 1.0
      %v714 = vadd.f32 %v706, 1.0
      %v715 = vadd.f32 %v707, 1.0
      %v716 = vadd.f32 %v708, 1.0
      %v717 = vadd.f32 %v709, 1.0
      %v718 = vadd.f32 %v710, 1.0
      %v719 = vadd.f32 %v711, 1.0
      %v720 = vmul.f32 %v688, %v712
      %v721 = vmul.f32 %v689, %v713
      %v722 = vmul.f32 %v690, %v714
      %v723 = vmul.f32 %v691, %v715
      %v724 = vmul.f32 %v692, %v716
      %v725 = vmul.f32 %v693, %v717
      %v726 = vmul.f32 %v694, %v718
      %v727 = vmul.f32 %v695, %v719
      %v728 = vmul.f32 %v720, %v666
      %v729 = vmul.f32 %v721, %v668
      %v730 = vmul.f32 %v722, %v672
      %v731 = vmul.f32 %v723, %v674
      %v732 = vmul.f32 %v724, %v678
      %v733 = vmul.f32 %v725, %v680
      %v734 = vmul.f32 %v726, %v684
      %v735 = vmul.f32 %v727, %v686
      %v736 = vld [vmem:[%s5] sm:$0xff]
      %v737 = vld [vmem:[%s5 + $0x8] sm:$0xff]
      %739 = vset.pattern.permute.xlu0 0
      %740 = vperm.xlu0 %739, %v736
      %v741 = vpop.permute.xlu0 %740
      %744 = vset.pattern.permute.xlu0 0
      %745 = vperm.xlu0 %744, %v737
      %v746 = vpop.permute.xlu0 %745
      %vm748 = vcmask 261120
      %v750 = vsel %vm748, %v500, 0
      %v753 = vsel %vm748, %v501, 0
      %755 = vmatprep.subr.mxu0 %v729
      %756 = vmatpush1.msra.mxu0 %v728
      %757 = vmatprep.subr.mxu0 %v731
      %758 = vmatpush1.msra.mxu0 %v730
      %759 = vmatprep.subr.mxu0 %v733
      %760 = vmatpush1.msra.mxu0 %v732
      %761 = vmatprep.subr.mxu0 %v735
      %762 = vmatpush1.msra.mxu0 %v734
      %763 = vmatprep.subr.mxu0 0.0
      %764 = vmatpush1.msra.mxu0 0.0
      %765 = vmatprep.subr.mxu0 0.0
      %766 = vmatpush1.msra.mxu0 0.0
      %767 = vmatprep.subr.mxu0 0.0
      %768 = vmatpush1.msra.mxu0 0.0
      %769 = vmatprep.subr.mxu0 0.0
      %770 = vmatpush1.msra.mxu0 0.0
      %771 = vmatprep.subr.mxu0 0.0
      %772 = vmatpush1.msra.mxu0 0.0
      %773 = vmatprep.subr.mxu0 0.0
      %774 = vmatpush1.msra.mxu0 0.0
      %775 = vmatprep.subr.mxu0 0.0
      %776 = vmatpush1.msra.mxu0 0.0
      %777 = vmatprep.subr.mxu0 0.0
      %778 = vmatpush1.msra.mxu0 0.0
      %779 = vmatprep.subr.mxu0 0.0
      %780 = vmatpush1.msra.mxu0 0.0
      %781 = vmatprep.subr.mxu0 0.0
      %782 = vmatpush1.msra.mxu0 0.0
      %783 = vmatprep.subr.mxu0 0.0
      %784 = vmatpush1.msra.mxu0 0.0
      %785 = vmatprep.subr.mxu0 0.0
      %786 = vmatpush1.msra.mxu0 0.0
      %787 = vmatprep.subr.mxu0 0.0
      %788 = vmatpush1.msra.mxu0 0.0
      %789 = vmatprep.subr.mxu0 0.0
      %790 = vmatpush1.msra.mxu0 0.0
      %791 = vmatprep.subr.mxu0 0.0
      %792 = vmatpush1.msra.mxu0 0.0
      %793 = vmatprep.subr.mxu0 0.0
      %794 = vmatpush1.msra.mxu0 0.0
      %795 = vmatprep.subr.mxu0 0.0
      %796 = vmatpush1.msra.mxu0 0.0
      %797 = vmatprep.subr.mxu0 0.0
      %798 = vmatpush1.msra.mxu0 0.0
      %799 = vmatprep.subr.mxu0 0.0
      %800 = vmatpush1.msra.mxu0 0.0
      %801 = vmatprep.subr.mxu0 0.0
      %802 = vmatpush1.msra.mxu0 0.0
      %803 = vmatprep.subr.mxu0 0.0
      %804 = vmatpush1.msra.mxu0 0.0
      %805 = vmatprep.subr.mxu0 0.0
      %806 = vmatpush1.msra.mxu0 0.0
      %807 = vmatprep.subr.mxu0 0.0
      %808 = vmatpush1.msra.mxu0 0.0
      %809 = vmatprep.subr.mxu0 0.0
      %810 = vmatpush1.msra.mxu0 0.0
      %811 = vmatprep.subr.mxu0 0.0
      %812 = vmatpush1.msra.mxu0 0.0
      %813 = vmatprep.subr.mxu0 0.0
      %814 = vmatpush1.msra.mxu0 0.0
      %815 = vmatprep.subr.mxu0 0.0
      %816 = vmatpush1.msra.mxu0 0.0
      %817 = vmatprep.subr.mxu0 0.0
      %818 = vmatpush1.msra.mxu0 0.0
      %819 = vmatprep.mubr.f32.mxu0 0.0
      %820 = vmatmul.mubr.f32.gmra.mrb[0].mxu0 %v750
      %v821 = vpop.f32.mrb[0].mxu0
      %v822 = vadd.f32 %v741, %v821
      %v823 = vpop.f32.mrb[0].mxu0
      %v824 = vadd.f32 %v741, %v823
      %825 = vmatprep.mubr.f32.mxu0 0.0
      %826 = vmatmul.mubr.f32.gmra.mrb[0].mxu0 %v753
      %v827 = vpop.f32.mrb[0].mxu0
      %v828 = vadd.f32 %v746, %v827
      %v829 = vpop.f32.mrb[0].mxu0
      %v830 = vadd.f32 %v746, %v829
      %831 = vdwg.mxu0
      %832 = vst [vmem:[%s251] sm:$0xff] %v822
      %833 = vst [vmem:[%s251 + $0x8] sm:$0xff] %v824
      %834 = vst [vmem:[%s251 + $0x10] sm:$0xff] %v828
      %835 = vst [vmem:[%s251 + $0x18] sm:$0xff] %v830
      %p836 = scmp.lt.s32.totalorder %s17, 1
      %s837 = scalar_select %p836, %s17, 1
      %s838 = smul.addr %s837, 4
      %s839 = smul.addr %s838, 8
      %s840 = scalar_lea.vmem %s6, %s839
      // Predicated region
      $region45: #{feedforward.1} parent=43 // pred_check
        %p841 = pneg %p166
      $region46: #{feedforward.1} parent=43 // pred_check_branch
        %843 = sbr.rel (%p841) target = $region48
      $region47: #{feedforward.1} parent=43 // pred_region
        _
      $region48: #{feedforward.1} parent=43 // pred_fallthru
        _
    $region44: #{feedforward.1} parent=5 // pred_fallthru
      _
    %p844 = scmp.le.s32.totalorder 2, %s12
    // Predicated region
    $region49: #{feedforward.1} parent=5 // pred_check
      %p845 = pneg %p844
    $region50: #{feedforward.1} parent=5 // pred_check_branch
      %847 = sbr.rel (%p845) target = $region52
    $region51: #{feedforward.1} parent=5 // pred_region
      %s848 = ssub.s32 %s12, 2
      // Predicated region
      $region53: #{feedforward.1} parent=51 // pred_check
        %p849 = pneg %p172
      $region54: #{feedforward.1} parent=51 // pred_check_branch
        %851 = sbr.rel (%p849) target = $region56
      $region55: #{feedforward.1} parent=51 // pred_region
        %p852 = scmp.lt.s32.totalorder %s18, 1
        %s853 = scalar_select %p852, %s18, 1
        %s854 = smul.addr %s853, 4
        %s855 = smul.addr %s854, 8
        %s856 = scalar_lea.vmem %s6, %s855
      $region56: #{feedforward.1} parent=51 // pred_fallthru
        _
    $region52: #{feedforward.1} parent=5 // pred_fallthru
      _
  $region6: #{feedforward.1} parent=0 // loop_footer
    %s16 = sadd.s32 1, %s12
  $region7: #{feedforward.1} parent=0 // loop_footer_branch
    %11 = sbr.rel target = $region3
  $region8: #{feedforward.1} parent=0 // loop_exit
    _

</llo_original>
